<compile_context>
chip_gen: v7x
topology: tpu7x:2x2x1
jax: 0.10.0
libtpu: 0.0.40
codegen_flags: <defaults>
</compile_context>

<pallas_src>
import jax
import jax.numpy as jnp
from jax.experimental import pallas as pl
from jax.experimental.pallas import tpu as pltpu


_FAST_DTYPES = (jnp.float32, jnp.bfloat16, jnp.float16)


def _sigmoid_math(x):
    # tanh form of the logistic: runs on the EUP slot, bf16/f32 stable.
    return 0.5 * jnp.tanh(0.5 * x) + 0.5


def _sigmoid_kernel(x_ref, o_ref):
    x = x_ref[...]
    # Compute natively in f32 / bf16; upcast anything else (f16) to f32.
    if x.dtype not in (jnp.float32, jnp.bfloat16):
        x = x.astype(jnp.float32)
    o_ref[...] = _sigmoid_math(x).astype(o_ref.dtype)


def _jax_fallback_float(x):
    """Pure-JAX path using the SAME formula as the kernel (keeps paths aligned)."""
    if x.dtype in (jnp.float32, jnp.bfloat16):
        return _sigmoid_math(x)
    return _sigmoid_math(x.astype(jnp.float32)).astype(x.dtype)


def _round_up(x, m):
    return -(-x // m) * m


def _ceil_div(a, b):
    return -(-a // b)


def _tpu_generation():
    """Best-effort TPU generation: 'v5e' | 'v6e' | 'v7x' | None (unknown)."""
    try:
        kind = jax.devices()[0].device_kind.lower()
    except Exception:
        return None
    if "v7" in kind or "tpu7" in kind or "tpu 7" in kind:
        return "v7x"
    if "v6" in kind or "6e" in kind:
        return "v6e"
    if "v5 lite" in kind or "v5e" in kind or "v5lite" in kind:
        return "v5e"
    return None


def sigmoid_pallas(
    x: jax.Array,
    *,
    donate: bool = False,
    min_pallas_bytes: int = 512 * 1024,
    force_pallas: bool = False,
) -> jax.Array:
    """Applies sigmoid elementwise via a Pallas TPU kernel."""
    orig_shape = x.shape
    orig_dtype = x.dtype
    n = x.size
    if n == 0:
        return x

    # Non-floating inputs: match jax.nn.sigmoid semantics (promotes to float).
    if orig_dtype not in _FAST_DTYPES:
        return jax.nn.sigmoid(x)

    itemsize = jnp.dtype(orig_dtype).itemsize

    # Small-size bypass: kernel launch + pipeline priming is pure overhead for
    # tiny tensors; XLA fuses a tiny sigmoid into its producer/consumer.
    if not force_pallas and n * itemsize < min_pallas_bytes:
        return _jax_fallback_float(x)

    # Lane-dense factorization: only n % 128 == 0 required.  Ragged row counts
    # (rows not a sublane multiple) are fine — the (8/16, 128) rule applies to
    # block_shape, and Pallas masks the partial last block.
    lanes = None
    for cand in (2048, 1024, 512, 256, 128):
        if n % cand == 0:
            lanes = cand
            break
    if lanes is None:
        # Ragged total size: padding would add two extra full HBM passes
        # around a bandwidth-bound op; let XLA handle it with the same math.
        return _jax_fallback_float(x)

    rows = n // lanes
    slab = x.reshape(rows, lanes)  # contiguous reshape: no data movement
    slab_bytes = n * itemsize

    # Minimum sublane multiple for a packed (sublane, 128) tile of this dtype.
    sublane = {4: 8, 2: 16, 1: 32}.get(itemsize, 8)

    gen = _tpu_generation()
    if gen in ("v6e", "v7x"):
        # ~4 MiB blocks: per-grid-step overhead (~0.35 us) drops below ~5% of
        # the ~5-6 us step time at 1.4-3.2 TB/s.  Footprint = 2-buf in +
        # 2-buf out ~= 16 MiB; allow it explicitly.
        target_block_bytes = 4 << 20
        vmem_limit_bytes = 32 << 20
    else:
        # v5e / unknown: keep the ~8 MiB double-buffer footprint under the
        # 16 MiB default scoped-VMEM limit; bigger tiles buy ~nothing at
        # v5e's ~0.82 TB/s (per-step overhead already < 10%).
        target_block_bytes = 2 << 20
        vmem_limit_bytes = None

    row_bytes = lanes * itemsize
    tile_rows = max(sublane, (target_block_bytes // row_bytes) // sublane * sublane)
    tile_rows = min(tile_rows, rows)

    # v7x only: force an even, balanced grid step count for big slabs so both
    # TensorCores share the stream (a single TC cannot saturate 3.2 TB/s).
    # Below ~8 MiB the extra step's fixed overhead exceeds the 2-TC gain.
    if gen == "v7x" and slab_bytes > (8 << 20):
        steps = max(2, _ceil_div(rows, tile_rows))
        for _ in range(8):
            if steps % 2:
                steps += 1
            cand = min(rows, max(sublane, _round_up(_ceil_div(rows, steps), sublane)))
            tile_rows = cand
            new_steps = _ceil_div(rows, cand)
            if new_steps % 2 == 0 or cand == sublane:
                break
            steps = new_steps + 1

    grid = (pl.cdiv(rows, tile_rows),)

    out = pl.pallas_call(
        _sigmoid_kernel,
        out_shape=jax.ShapeDtypeStruct((rows, lanes), orig_dtype),
        grid_spec=pltpu.PrefetchScalarGridSpec(
            num_scalar_prefetch=0,
            grid=grid,
            in_specs=[pl.BlockSpec((tile_rows, lanes), lambda i: (i, 0))],
            out_specs=pl.BlockSpec((tile_rows, lanes), lambda i: (i, 0)),
        ),
        compiler_params=pltpu.CompilerParams(
            dimension_semantics=("parallel",),
            vmem_limit_bytes=vmem_limit_bytes,
        ),
        # Opt-in alias: saves a second full-size HBM buffer when x is donatable.
        input_output_aliases={0: 0} if donate else {},
    )(slab)

    return out.reshape(orig_shape)


if __name__ == "__main__":
    # Small NCHW input consistent with the module's forward (image-like tensor).
    key = jax.random.PRNGKey(0)
    x = jax.random.normal(key, (2, 4, 16, 16), dtype=jnp.float32)

    # force_pallas=True so the demo actually exercises the Pallas kernel even
    # though this input is below the small-size bypass threshold.
    y = jax.block_until_ready(sigmoid_pallas(x, force_pallas=True))
    y_ref = jax.nn.sigmoid(x)
    assert y.shape == x.shape and y.dtype == x.dtype
    assert jnp.max(jnp.abs(y - y_ref)) < 1e-5

    # Medium f32 input (8 MiB) to exercise the multi-step pipelined grid path.
    x2 = jax.random.normal(jax.random.PRNGKey(1), (4, 8, 256, 256), dtype=jnp.float32)
    y2 = jax.block_until_ready(sigmoid_pallas(x2))
    y2_ref = jax.nn.sigmoid(x2)
    assert y2.shape == x2.shape and y2.dtype == x2.dtype
    assert jnp.max(jnp.abs(y2 - y2_ref)) < 1e-5

    # bf16 path (computed natively in bf16 on the EUP).
    x3 = jax.random.normal(jax.random.PRNGKey(2), (8, 16, 64, 128), dtype=jnp.bfloat16)
    y3 = jax.block_until_ready(sigmoid_pallas(x3, force_pallas=True))
    y3_ref = jax.nn.sigmoid(x3)
    assert y3.shape == x3.shape and y3.dtype == x3.dtype
    assert jnp.max(jnp.abs(y3.astype(jnp.float32) - y3_ref.astype(jnp.float32))) < 2e-2

    print("KERNEL_OK")
</pallas_src>

<mosaic_0001>
module attributes {stable_mosaic.version = 11 : i64} {
  func.func @_sigmoid_kernel(%arg0: i32, %arg1: memref<1x2048xf32, #tpu.memory_space<vmem>>, %arg2: memref<1x2048xf32, #tpu.memory_space<vmem>>) attributes {dimension_semantics = [#tpu.dimension_semantics<parallel>], iteration_bounds = array<i64: 1>, scalar_prefetch = 0 : i64, scratch_operands = 0 : i64, tpu.core_type = #tpu.core_type<tc>, window_params = [{transform_indices = @transform_0, window_bounds = array<i64: 1, 2048>}, {transform_indices = @transform_1, window_bounds = array<i64: 1, 2048>}]} {
    %c0 = arith.constant 0 : index
    %c0_0 = arith.constant 0 : index
    %0 = vector.load %arg1[%c0, %c0_0] : memref<1x2048xf32, #tpu.memory_space<vmem>>, vector<1x2048xf32>
    %cst = arith.constant 5.000000e-01 : f32
    %1 = vector.broadcast %cst : f32 to vector<1x2048xf32>
    %2 = arith.mulf %1, %0 : vector<1x2048xf32>
    %3 = math.tanh %2 : vector<1x2048xf32>
    %cst_1 = arith.constant 5.000000e-01 : f32
    %4 = vector.broadcast %cst_1 : f32 to vector<1x2048xf32>
    %5 = arith.mulf %4, %3 : vector<1x2048xf32>
    %cst_2 = arith.constant 5.000000e-01 : f32
    %6 = vector.broadcast %cst_2 : f32 to vector<1x2048xf32>
    %7 = arith.addf %5, %6 : vector<1x2048xf32>
    %c0_3 = arith.constant 0 : index
    %c0_4 = arith.constant 0 : index
    %8 = vector.load %arg2[%c0_3, %c0_4] : memref<1x2048xf32, #tpu.memory_space<vmem>>, vector<1x2048xf32>
    tpu.vector_store %arg2[%c0_3, %c0_4], %7 {strides = array<i32>} : memref<1x2048xf32, #tpu.memory_space<vmem>>, vector<1x2048xf32>,
    return
  }
  func.func @transform_0(%arg0: i32) -> (i32, i32) {
    %c0_i32 = arith.constant 0 : i32
    %c0_i32_0 = arith.constant 0 : i32
    return %arg0, %c0_i32 : i32, i32
  }
  func.func @transform_1(%arg0: i32) -> (i32, i32) {
    %c0_i32 = arith.constant 0 : i32
    %c0_i32_0 = arith.constant 0 : i32
    return %arg0, %c0_i32 : i32, i32
  }
}

</mosaic_0001>

<llo_original>
// kernel: tpu_custom_call.1
$region0: #{tpu_custom_call.1}
  #allocation0 [shape = 'u32[]', space=smem, size = 0x4, offset = 0x4, fixed_abs, tag = 'smem constant byte address 0x4 - core index']
  #allocation1 [shape = 'u32[144,128]{1,0:T(1,128)}', space=vmem, size = 0x12000, scoped, tag = 'internal scratch']
  %s0 = inlined_call_operand.hbm [shape: f32[1,2048], index: 0, kind: input, shape index: {}]
  %s1 = inlined_call_operand.hbm [shape: f32[1,2048], index: 1, kind: output, shape index: {}]
  %s2 = sld [smem:[#allocation0]]
  $region18: #{tpu_custom_call.1} parent=0
    _
  %s4 = ssub.s32 1, %s2
  %s5 = scalar_select 0, %s4, %s2
  $region1: #{tpu_custom_call.1} parent=0
    #allocation2 [shape = 'u8[8192]{0}', space=vmem, size = 0x2000, scoped, tag = 'input window, operand 0, single buffered']
    #allocation3 [shape = 's32[1]{0}', space=sflag, size = 0x4, scoped, tag = 'scoped memory for tpu_custom_call.1']
    #allocation4 [shape = 's32[1]{0}', space=sflag, size = 0x4, scoped, tag = 'scoped memory for tpu_custom_call.1']
    #allocation5 [shape = 'u8[8192]{0}', space=vmem, size = 0x2000, scoped, tag = 'output window, operand 0, single buffered']
    %6 = vsyncpa [#allocation3], 0
    %7 = vsyncpa [#allocation4], 0
    // Predicated region
    $region2: #{tpu_custom_call.1} parent=1 // pred_check
      _
    $region3: #{tpu_custom_call.1} parent=1 // pred_check_branch
      %9 = sbr.rel (0) target = $region5
    $region4: #{tpu_custom_call.1} parent=1 // pred_region
      %s11 = ssub.s32 256, 256
      %12 = vsyncadd [#allocation3], %s11
      %s14 = sshll.u32 [#allocation2], 4
      %s15 = int_to_ptr.vmem [resolvable:$true] %s14
      %17 = dma.hbm_to_vmem [thread:$0]  %s0, 256, %s15, [#allocation3]
    $region5: #{tpu_custom_call.1} parent=1 // pred_fallthru
      _
    // Predicated region
    $region6: #{tpu_custom_call.1} parent=1 // pred_check
      _
    $region7: #{tpu_custom_call.1} parent=1 // pred_check_branch
      %19 = sbr.rel (0) target = $region9
    $region8: #{tpu_custom_call.1} parent=1 // pred_region
      %20 = dma.done [#allocation3], 256
    $region9: #{tpu_custom_call.1} parent=1 // pred_fallthru
      _
    %v21 = vld [vmem:[#allocation2] sm:$0xff]
    %v22 = vld [vmem:[#allocation2 + $0x8] sm:$0xff]
    %v23 = vmul.f32 %v21, 0.5
    %v24 = vmul.f32 %v22, 0.5
    %v25 = vtanh.pop %v23
    %v26 = vtanh.pop %v24
    %v27 = vmul.f32 %v25, 0.5
    %v28 = vmul.f32 %v26, 0.5
    %v29 = vadd.f32 %v27, 0.5
    %v30 = vadd.f32 %v28, 0.5
    %31 = vst [vmem:[#allocation5] sm:$0xff] %v29
    %32 = vst [vmem:[#allocation5 + $0x8] sm:$0xff] %v30
    // Predicated region
    $region10: #{tpu_custom_call.1} parent=1 // pred_check
      _
    $region11: #{tpu_custom_call.1} parent=1 // pred_check_branch
      %34 = sbr.rel (0) target = $region13
    $region12: #{tpu_custom_call.1} parent=1 // pred_region
      %s36 = ssub.s32 256, 256
      %37 = vsyncadd [#allocation4], %s36
      %s39 = sshll.u32 [#allocation5], 4
      %s40 = int_to_ptr.vmem [resolvable:$true] %s39
      %42 = dma.vmem_to_hbm [thread:$0]  %s40, 256, %s1, [#allocation4]
    $region13: #{tpu_custom_call.1} parent=1 // pred_fallthru
      _
    // Predicated region
    $region14: #{tpu_custom_call.1} parent=1 // pred_check
      _
    $region15: #{tpu_custom_call.1} parent=1 // pred_check_branch
      %44 = sbr.rel (0) target = $region17
    $region16: #{tpu_custom_call.1} parent=1 // pred_region
      %45 = dma.done [#allocation4], 256
    $region17: #{tpu_custom_call.1} parent=1 // pred_fallthru
      _
    %46 = vsyncpa [#allocation3], 1
    %47 = vsyncpa [#allocation4], 1

</llo_original>
